<compile_context>
chip_gen: v7x
topology: tpu7x:2x2x1
jax: 0.10.0
libtpu: 0.0.40
codegen_flags: <defaults>
</compile_context>

<pallas_src>
import jax
import jax.numpy as jnp
from jax.experimental import pallas as pl
from jax.experimental.pallas import tpu as pltpu


_TARGET_BLOCK_BYTES = 8 * 1024 * 1024     # ~8 MiB blocks (per-step overhead < ~7% even on v7x)
_VMEM_LIMIT_BYTES = 40 * 1024 * 1024      # 2-in + 2-out * 8 MiB = 32 MiB + headroom
_SMALL_TOTAL_BYTES = 4 * 1024 * 1024      # oddball shapes below this: single full-extent block


def _copy_kernel(x_ref, o_ref):
    # Pure VMEM tile copy of the flattened tensor.
    o_ref[...] = x_ref[...]


def _tiled_copy(arr, block_shape, grid, index_map):
    """Pipelined HBM->VMEM->HBM copy of `arr` with the given tiling."""
    itemsize = jnp.dtype(arr.dtype).itemsize
    return pl.pallas_call(
        _copy_kernel,
        out_shape=jax.ShapeDtypeStruct(arr.shape, arr.dtype),
        grid_spec=pltpu.PrefetchScalarGridSpec(
            num_scalar_prefetch=0,
            grid=grid,
            in_specs=[pl.BlockSpec(block_shape, index_map)],
            out_specs=pl.BlockSpec(block_shape, index_map),
        ),
        compiler_params=pltpu.CompilerParams(
            # Fully independent axis -> shards across TCs on multi-core parts.
            dimension_semantics=("parallel",) * len(grid),
            vmem_limit_bytes=_VMEM_LIMIT_BYTES,
        ),
        cost_estimate=pl.CostEstimate(
            flops=0,
            transcendentals=0,
            bytes_accessed=2 * arr.size * itemsize,
        ),
    )(arr)


def _sublane_multiple(itemsize: int) -> int:
    # f32 -> 8 rows/vreg, bf16 -> 16, int8/fp8 -> 32 (sub-32-bit packs sublanes).
    return 8 * max(1, 4 // itemsize)


def vectorize(x: jax.Array,
              force_copy: bool = False,
              target_block_bytes: int = _TARGET_BLOCK_BYTES) -> jax.Array:
    """Equivalent of Vectorize.forward: returns x reshaped to (B, -1)."""
    B = x.shape[0]
    F = 1
    for d in x.shape[1:]:
        F *= d
    total = B * F
    itemsize = jnp.dtype(x.dtype).itemsize

    # Row-major flatten (matches torch .view on contiguous NCHW). This reshape
    # is metadata-only.
    x_flat = jnp.reshape(x, (B, F))

    # Zero-copy early-out: the op is free; only run the copy kernel on request.
    if not force_copy:
        return x_flat

    # Fast path: sublane/lane-dense re-layout (rows, lane) with lane a multiple
    # of 128 and row tiles a multiple of the dtype's packed-sublane count.
    lane = None
    for cand in (512, 256, 128):
        if total % cand == 0:
            lane = cand
            break

    if lane is not None:
        rows = total // lane
        sub = _sublane_multiple(itemsize)
        target_rows = max(sub, (target_block_bytes // (lane * itemsize)) // sub * sub)
        # row_tile is a multiple of `sub`, or the full row extent (both legal).
        row_tile = target_rows if rows > target_rows else rows

        # Multi-TC (v7x) hint: if everything fits in one block but there are at
        # least two minimal tiles worth of rows, split into >=2 parallel steps.
        if row_tile == rows and rows >= 2 * sub:
            half = -(-rows // 2)
            row_tile = min(rows, -(-half // sub) * sub)

        x2 = jnp.reshape(x_flat, (rows, lane))
        out2 = _tiled_copy(
            x2,
            block_shape=(row_tile, lane),
            grid=(pl.cdiv(rows, row_tile),),
            index_map=lambda i: (i, 0),
        )
        return jnp.reshape(out2, (B, F))

    # Oddball shapes (total not a multiple of 128):
    if total * itemsize <= _SMALL_TOTAL_BYTES:
        # Single full-extent block: legal regardless of (8,128) divisibility
        # and VMEM-safe at this size.
        return _tiled_copy(
            x_flat,
            block_shape=(B, F),
            grid=(1,),
            index_map=lambda i: (0, 0),
        )

    # TODO(synk): large non-128-multiple totals use the free metadata reshape
    # instead of a sublane-sparse / masked-store kernel path.
    return x_flat


if __name__ == "__main__":
    key = jax.random.PRNGKey(0)

    # Small NCHW input consistent with a conv-net feature map.
    x = jax.random.normal(key, (2, 4, 16, 16), dtype=jnp.float32)
    y_ref = jnp.reshape(x, (x.shape[0], -1))

    # Default path: zero-copy metadata reshape.
    y0 = jax.block_until_ready(vectorize(x))
    assert y0.shape == (2, 4 * 16 * 16), y0.shape
    assert y0.dtype == x.dtype
    assert bool(jnp.array_equal(y0, y_ref))

    # Kernel path (force_copy): lane-dense tiled copy.
    y1 = jax.block_until_ready(vectorize(x, force_copy=True))
    assert y1.shape == (2, 4 * 16 * 16), y1.shape
    assert y1.dtype == x.dtype
    assert bool(jnp.array_equal(y1, y_ref))

    # bf16 input exercises the dtype-aware sublane rounding.
    xb = jax.random.normal(key, (2, 8, 16, 16), dtype=jnp.bfloat16)
    yb = jax.block_until_ready(vectorize(xb, force_copy=True))
    yb_ref = jnp.reshape(xb, (xb.shape[0], -1))
    assert yb.shape == (2, 8 * 16 * 16), yb.shape
    assert yb.dtype == xb.dtype
    assert bool(jnp.array_equal(yb, yb_ref))

    # Oddball shape (total not a multiple of 128) -> small full-extent block.
    x2 = jax.random.normal(key, (2, 3, 5, 5), dtype=jnp.float32)
    y2 = jax.block_until_ready(vectorize(x2, force_copy=True))
    y2_ref = jnp.reshape(x2, (x2.shape[0], -1))
    assert y2.shape == (2, 75), y2.shape
    assert bool(jnp.array_equal(y2, y2_ref))

    print("KERNEL_OK")
</pallas_src>

<mosaic_0001>
module attributes {stable_mosaic.version = 11 : i64} {
  func.func @_copy_kernel(%arg0: i32, %arg1: memref<4x512xf32, #tpu.memory_space<vmem>>, %arg2: memref<4x512xf32, #tpu.memory_space<vmem>>) attributes {dimension_semantics = [#tpu.dimension_semantics<parallel>], iteration_bounds = array<i64: 1>, scalar_prefetch = 0 : i64, scratch_operands = 0 : i64, tpu.core_type = #tpu.core_type<tc>, window_params = [{transform_indices = @transform_0, window_bounds = array<i64: 4, 512>}, {transform_indices = @transform_1, window_bounds = array<i64: 4, 512>}]} {
    %c0 = arith.constant 0 : index
    %c0_0 = arith.constant 0 : index
    %0 = vector.load %arg1[%c0, %c0_0] : memref<4x512xf32, #tpu.memory_space<vmem>>, vector<4x512xf32>
    %c0_1 = arith.constant 0 : index
    %c0_2 = arith.constant 0 : index
    %1 = vector.load %arg2[%c0_1, %c0_2] : memref<4x512xf32, #tpu.memory_space<vmem>>, vector<4x512xf32>
    tpu.vector_store %arg2[%c0_1, %c0_2], %0 {strides = array<i32>} : memref<4x512xf32, #tpu.memory_space<vmem>>, vector<4x512xf32>,
    return
  }
  func.func @transform_0(%arg0: i32) -> (i32, i32) {
    %c0_i32 = arith.constant 0 : i32
    %c0_i32_0 = arith.constant 0 : i32
    return %arg0, %c0_i32 : i32, i32
  }
  func.func @transform_1(%arg0: i32) -> (i32, i32) {
    %c0_i32 = arith.constant 0 : i32
    %c0_i32_0 = arith.constant 0 : i32
    return %arg0, %c0_i32 : i32, i32
  }
}

</mosaic_0001>

<llo_original>
// kernel: tpu_custom_call.1
$region0: #{tpu_custom_call.1}
  #allocation0 [shape = 'u32[]', space=smem, size = 0x4, offset = 0x4, fixed_abs, tag = 'smem constant byte address 0x4 - core index']
  #allocation1 [shape = 'u32[144,128]{1,0:T(1,128)}', space=vmem, size = 0x12000, scoped, tag = 'internal scratch']
  %s0 = inlined_call_operand.hbm [shape: f32[4,512], index: 0, kind: input, shape index: {}]
  %s1 = inlined_call_operand.hbm [shape: f32[4,512], index: 1, kind: output, shape index: {}]
  %s2 = sld [smem:[#allocation0]]
  $region18: #{tpu_custom_call.1} parent=0
    _
  %s4 = ssub.s32 1, %s2
  %s5 = scalar_select 0, %s4, %s2
  $region1: #{tpu_custom_call.1} parent=0
    #allocation2 [shape = 'u8[8192]{0}', space=vmem, size = 0x2000, scoped, tag = 'input window, operand 0, single buffered']
    #allocation3 [shape = 's32[1]{0}', space=sflag, size = 0x4, scoped, tag = 'scoped memory for tpu_custom_call.1']
    #allocation4 [shape = 's32[1]{0}', space=sflag, size = 0x4, scoped, tag = 'scoped memory for tpu_custom_call.1']
    #allocation5 [shape = 'u8[8192]{0}', space=vmem, size = 0x2000, scoped, tag = 'output window, operand 0, single buffered']
    %6 = vsyncpa [#allocation3], 0
    %7 = vsyncpa [#allocation4], 0
    // Predicated region
    $region2: #{tpu_custom_call.1} parent=1 // pred_check
      _
    $region3: #{tpu_custom_call.1} parent=1 // pred_check_branch
      %9 = sbr.rel (0) target = $region5
    $region4: #{tpu_custom_call.1} parent=1 // pred_region
      %s11 = ssub.s32 256, 256
      %12 = vsyncadd [#allocation3], %s11
      %s14 = sshll.u32 [#allocation2], 4
      %s15 = int_to_ptr.vmem [resolvable:$true] %s14
      %17 = dma.hbm_to_vmem [thread:$0]  %s0, 256, %s15, [#allocation3]
    $region5: #{tpu_custom_call.1} parent=1 // pred_fallthru
      _
    // Predicated region
    $region6: #{tpu_custom_call.1} parent=1 // pred_check
      _
    $region7: #{tpu_custom_call.1} parent=1 // pred_check_branch
      %19 = sbr.rel (0) target = $region9
    $region8: #{tpu_custom_call.1} parent=1 // pred_region
      %20 = dma.done [#allocation3], 256
    $region9: #{tpu_custom_call.1} parent=1 // pred_fallthru
      _
    %v21 = vld [vmem:[#allocation2] sm:$0xff]
    %v22 = vld [vmem:[#allocation2 + $0x8] sm:$0xff]
    %23 = vst [vmem:[#allocation5] sm:$0xff] %v21
    %24 = vst [vmem:[#allocation5 + $0x8] sm:$0xff] %v22
    // Predicated region
    $region10: #{tpu_custom_call.1} parent=1 // pred_check
      _
    $region11: #{tpu_custom_call.1} parent=1 // pred_check_branch
      %26 = sbr.rel (0) target = $region13
    $region12: #{tpu_custom_call.1} parent=1 // pred_region
      %s28 = ssub.s32 256, 256
      %29 = vsyncadd [#allocation4], %s28
      %s31 = sshll.u32 [#allocation5], 4
      %s32 = int_to_ptr.vmem [resolvable:$true] %s31
      %34 = dma.vmem_to_hbm [thread:$0]  %s32, 256, %s1, [#allocation4]
    $region13: #{tpu_custom_call.1} parent=1 // pred_fallthru
      _
    // Predicated region
    $region14: #{tpu_custom_call.1} parent=1 // pred_check
      _
    $region15: #{tpu_custom_call.1} parent=1 // pred_check_branch
      %36 = sbr.rel (0) target = $region17
    $region16: #{tpu_custom_call.1} parent=1 // pred_region
      %37 = dma.done [#allocation4], 256
    $region17: #{tpu_custom_call.1} parent=1 // pred_fallthru
      _
    %38 = vsyncpa [#allocation3], 1
    %39 = vsyncpa [#allocation4], 1

</llo_original>
